<compile_context>
chip_gen: v5e
topology: v5e:2x2
jax: 0.10.0
libtpu: 0.0.40
codegen_flags: <defaults>
</compile_context>

<pallas_src>
import jax
import jax.numpy as jnp
from jax.experimental import pallas as pl
from jax.experimental.pallas import tpu as pltpu


def _round_up(n, m):
    return ((n + m - 1) // m) * m


def _device_kind():
    try:
        return jax.devices()[0].device_kind.lower()
    except Exception:
        return ""


def _default_gang_k():
    """k rows folded into lanes: 8 on 256-wide-MXU chips (v6e/v7x), else 4."""
    dk = _device_kind()
    if ("v6" in dk) or ("v7" in dk):
        return 8
    return 4


def _actor_mlp_kernel(x_ref,
                      w1_ref, b1_ref,
                      w2_ref, b2_ref,
                      w3_ref, b3_ref,
                      out_ref):
    """One packed batch tile of the 3-layer MLP, fully VMEM-resident.

    Operands are the 'ganged' (block-diagonal) shapes; weights arrive as bf16 and
    stay resident across the grid, activations are cast to bf16 right before each
    dot, accumulation stays f32 on the MXU.
    """
    x = x_ref[...].astype(jnp.bfloat16)

    # Layer 1: Linear + ReLU
    h = jnp.dot(x, w1_ref[...], preferred_element_type=jnp.float32) + b1_ref[...]
    h = jnp.maximum(h, 0.0)

    # Layer 2: Linear + ReLU
    h = jnp.dot(h.astype(jnp.bfloat16), w2_ref[...],
                preferred_element_type=jnp.float32) + b2_ref[...]
    h = jnp.maximum(h, 0.0)

    # Layer 3 (plain last: no activation)
    out_ref[...] = (jnp.dot(h.astype(jnp.bfloat16), w3_ref[...],
                            preferred_element_type=jnp.float32) + b3_ref[...])


def pack_actor_params(params, k=None):
    """Build the block-diagonal ('ganged') bf16 weights ONCE, outside the per-call path.

    W_bd = kron(I_k, W)  (w on the diagonal blocks), biases tiled k times (kept f32
    since they are added to the f32 MXU accumulator).
    """
    if k is None:
        k = _default_gang_k()

    def bd(w):
        return jnp.kron(jnp.eye(k, dtype=w.dtype), w).astype(jnp.bfloat16)

    def tb(b):
        return jnp.tile(b, (1, k)).astype(jnp.float32)

    return {
        "k": int(k),
        "in_dim": int(params["w1"].shape[0]),
        "out_dim": int(params["w3"].shape[1]),
        "w1": bd(params["w1"]), "b1": tb(params["b1"]),
        "w2": bd(params["w2"]), "b2": tb(params["b2"]),
        "w3": bd(params["w3"]), "b3": tb(params["b3"]),
    }


def actor_forward(x, packed, *, tile_b=8192):
    """x: (B, in_dim) float32 (or bf16) -> (B, out_dim) float32.

    `packed` comes from pack_actor_params. tile_b is in LOGICAL batch rows.
    """
    B, in_dim = x.shape
    k = packed["k"]
    out_dim = packed["out_dim"]
    assert in_dim == packed["in_dim"], "input feature dim mismatch"

    # Pad B to a multiple of 8*k: the lane-fold reshape is then exact and the packed
    # row count is sublane-aligned. Pad rows are zeros; output is sliced back.
    B_pad = _round_up(max(B, 1), 8 * k)
    if B_pad != B:
        x = jnp.pad(x, ((0, B_pad - B), (0, 0)))

    rows = B_pad // k                       # packed row count (multiple of 8)
    x_p = x.reshape(rows, in_dim * k)       # free, row-major

    # Packed-row tile: multiple of 8, clamped to the array (fixes odd user tile_b).
    tile_rows = _round_up(max(tile_b // k, 8), 8)
    tile_rows = min(tile_rows, rows)
    grid = (pl.cdiv(rows, tile_rows),)

    w1, b1 = packed["w1"], packed["b1"]
    w2, b2 = packed["w2"], packed["b2"]
    w3, b3 = packed["w3"], packed["b3"]

    def row_spec(cols):
        # Batch-tiled operands: new block per grid step (double-buffered stream).
        return pl.BlockSpec((tile_rows, cols), lambda i: (i, 0))

    def const_spec(arr):
        # Weights/biases: same block every step -> DMA'd once, stay VMEM-resident.
        return pl.BlockSpec(arr.shape, lambda i: (0, 0))

    in_specs = [
        row_spec(in_dim * k),
        const_spec(w1), const_spec(b1),
        const_spec(w2), const_spec(b2),
        const_spec(w3), const_spec(b3),
    ]
    out_specs = pl.BlockSpec((tile_rows, out_dim * k), lambda i: (i, 0))
    out_shape = jax.ShapeDtypeStruct((rows, out_dim * k), jnp.float32)

    # Explicit VMEM budget (packed tiles are small; 48 MiB is safe on v5e/v6e/v7x).
    vmem_limit = 48 * 1024 * 1024

    def _call(dim_sem):
        return pl.pallas_call(
            _actor_mlp_kernel,
            out_shape=out_shape,
            grid=grid,
            in_specs=in_specs,
            out_specs=out_specs,
            compiler_params=pltpu.CompilerParams(
                dimension_semantics=dim_sem,
                vmem_limit_bytes=vmem_limit),
        )(x_p, w1, b1, w2, b2, w3, b3)

    # v7x: shard the batch grid axis across its two TensorCores.
    if "v7" in _device_kind():
        try:
            out_p = _call((pltpu.CORE_PARALLEL,))
        except Exception:
            out_p = _call((pltpu.PARALLEL,))
    else:
        out_p = _call((pltpu.PARALLEL,))

    out = out_p.reshape(B_pad, out_dim)     # free, row-major un-fold
    return out[:B] if B_pad != B else out


def init_params(key, in_dim, hidden_layers, out_dim):
    """PyTorch-Linear-style init for channel_list = [in_dim, *hidden_layers, out_dim]."""
    dims = [in_dim] + list(hidden_layers) + [out_dim]
    params = {}
    names = ["1", "2", "3"]
    assert len(dims) - 1 == len(names)
    for i, n in enumerate(names):
        key, kw, kb = jax.random.split(key, 3)
        fan_in = dims[i]
        bound = 1.0 / jnp.sqrt(jnp.float32(fan_in))
        params[f"w{n}"] = jax.random.uniform(
            kw, (dims[i], dims[i + 1]), jnp.float32, -bound, bound)
        # Keep biases 2D (1, out) for TPU-friendly broadcasting inside the kernel.
        params[f"b{n}"] = jax.random.uniform(
            kb, (1, dims[i + 1]), jnp.float32, -bound, bound)
    return params


def reference_forward(x, params):
    """Pure-JAX f32 reference of the Actor MLP (graph_mode=False)."""
    h = jnp.maximum(x @ params["w1"] + params["b1"], 0.0)
    h = jnp.maximum(h @ params["w2"] + params["b2"], 0.0)
    return h @ params["w3"] + params["b3"]


if __name__ == "__main__":
    # Small shapes consistent with the module:
    #   obs feature_size = 16, action_space.shape = (4,)  -> in_dim = 16 + 4 = 20
    #   actor_hidden_layer_nodes = [32, 32], output dim = prod(action_shape) = 4
    # Batch 512 with tile_b=128 exercises a multi-step grid (pipelining + resident weights
    # + gang packing + output un-fold).
    B = 512
    feature_size = 16
    action_dim = 4
    in_dim = feature_size + action_dim
    hidden = [32, 32]

    key = jax.random.PRNGKey(0)
    kx, kp = jax.random.split(key, 2)
    x = jax.random.normal(kx, (B, in_dim), jnp.float32)
    params = init_params(kp, in_dim, hidden, action_dim)

    packed = pack_actor_params(params)          # one-time weight prep (bf16, block-diag)
    out = actor_forward(x, packed, tile_b=128)
    out = jax.block_until_ready(out)

    ref = reference_forward(x, params)
    assert out.shape == (B, action_dim)
    # bf16 MXU operands with f32 accumulation: loosen tolerance vs the f32 reference.
    assert jnp.allclose(out, ref, atol=5e-2, rtol=5e-2), "mismatch vs JAX reference"
    print("KERNEL_OK")
</pallas_src>

<mosaic_0001>
module attributes {stable_mosaic.version = 11 : i64} {
  func.func @_actor_mlp_kernel(%arg0: i32, %arg1: memref<32x80xf32, #tpu.memory_space<vmem>>, %arg2: memref<80x128xbf16, #tpu.memory_space<vmem>>, %arg3: memref<1x128xf32, #tpu.memory_space<vmem>>, %arg4: memref<128x128xbf16, #tpu.memory_space<vmem>>, %arg5: memref<1x128xf32, #tpu.memory_space<vmem>>, %arg6: memref<128x16xbf16, #tpu.memory_space<vmem>>, %arg7: memref<1x16xf32, #tpu.memory_space<vmem>>, %arg8: memref<32x16xf32, #tpu.memory_space<vmem>>) attributes {dimension_semantics = [#tpu.dimension_semantics<parallel>], iteration_bounds = array<i64: 4>, scalar_prefetch = 0 : i64, scratch_operands = 0 : i64, tpu.core_type = #tpu.core_type<tc>, window_params = [{transform_indices = @transform_0, window_bounds = array<i64: 32, 80>}, {pipeline_mode = #tpu.pipeline_mode<synchronous>, transform_indices = @transform_1, window_bounds = array<i64: 80, 128>}, {pipeline_mode = #tpu.pipeline_mode<synchronous>, transform_indices = @transform_2, window_bounds = array<i64: 1, 128>}, {pipeline_mode = #tpu.pipeline_mode<synchronous>, transform_indices = @transform_3, window_bounds = array<i64: 128, 128>}, {pipeline_mode = #tpu.pipeline_mode<synchronous>, transform_indices = @transform_4, window_bounds = array<i64: 1, 128>}, {pipeline_mode = #tpu.pipeline_mode<synchronous>, transform_indices = @transform_5, window_bounds = array<i64: 128, 16>}, {pipeline_mode = #tpu.pipeline_mode<synchronous>, transform_indices = @transform_6, window_bounds = array<i64: 1, 16>}, {transform_indices = @transform_7, window_bounds = array<i64: 32, 16>}]} {
    %c0 = arith.constant 0 : index
    %c0_0 = arith.constant 0 : index
    %0 = vector.load %arg1[%c0, %c0_0] : memref<32x80xf32, #tpu.memory_space<vmem>>, vector<32x80xf32>
    %1 = arith.truncf %0 : vector<32x80xf32> to vector<32x80xbf16>
    %c0_1 = arith.constant 0 : index
    %c0_2 = arith.constant 0 : index
    %2 = vector.load %arg2[%c0_1, %c0_2] : memref<80x128xbf16, #tpu.memory_space<vmem>>, vector<80x128xbf16>
    %cst = arith.constant dense<0.000000e+00> : vector<32x128xf32>
    %3 = tpu.matmul %1, %2, %cst {dimension_numbers = #tpu.dot_dimension_numbers<[1], [0], [0], [1], [0, 0, 1, 1], [], []>} : vector<32x80xbf16>, vector<80x128xbf16>, vector<32x128xf32> -> vector<32x128xf32>
    %c0_3 = arith.constant 0 : index
    %c0_4 = arith.constant 0 : index
    %4 = vector.load %arg3[%c0_3, %c0_4] : memref<1x128xf32, #tpu.memory_space<vmem>>, vector<1x128xf32>
    %5 = vector.broadcast %4 : vector<1x128xf32> to vector<32x128xf32>
    %6 = arith.addf %3, %5 : vector<32x128xf32>
    %cst_5 = arith.constant 0.000000e+00 : f32
    %7 = vector.broadcast %cst_5 : f32 to vector<32x128xf32>
    %8 = arith.maximumf %6, %7 : vector<32x128xf32>
    %9 = arith.truncf %8 : vector<32x128xf32> to vector<32x128xbf16>
    %c0_6 = arith.constant 0 : index
    %c0_7 = arith.constant 0 : index
    %10 = vector.load %arg4[%c0_6, %c0_7] : memref<128x128xbf16, #tpu.memory_space<vmem>>, vector<128x128xbf16>
    %cst_8 = arith.constant dense<0.000000e+00> : vector<32x128xf32>
    %11 = tpu.matmul %9, %10, %cst_8 {dimension_numbers = #tpu.dot_dimension_numbers<[1], [0], [0], [1], [0, 0, 1, 1], [], []>} : vector<32x128xbf16>, vector<128x128xbf16>, vector<32x128xf32> -> vector<32x128xf32>
    %c0_9 = arith.constant 0 : index
    %c0_10 = arith.constant 0 : index
    %12 = vector.load %arg5[%c0_9, %c0_10] : memref<1x128xf32, #tpu.memory_space<vmem>>, vector<1x128xf32>
    %13 = vector.broadcast %12 : vector<1x128xf32> to vector<32x128xf32>
    %14 = arith.addf %11, %13 : vector<32x128xf32>
    %cst_11 = arith.constant 0.000000e+00 : f32
    %15 = vector.broadcast %cst_11 : f32 to vector<32x128xf32>
    %16 = arith.maximumf %14, %15 : vector<32x128xf32>
    %17 = arith.truncf %16 : vector<32x128xf32> to vector<32x128xbf16>
    %c0_12 = arith.constant 0 : index
    %c0_13 = arith.constant 0 : index
    %18 = vector.load %arg6[%c0_12, %c0_13] : memref<128x16xbf16, #tpu.memory_space<vmem>>, vector<128x16xbf16>
    %cst_14 = arith.constant dense<0.000000e+00> : vector<32x16xf32>
    %19 = tpu.matmul %17, %18, %cst_14 {dimension_numbers = #tpu.dot_dimension_numbers<[1], [0], [0], [1], [0, 0, 1, 1], [], []>} : vector<32x128xbf16>, vector<128x16xbf16>, vector<32x16xf32> -> vector<32x16xf32>
    %c0_15 = arith.constant 0 : index
    %c0_16 = arith.constant 0 : index
    %20 = vector.load %arg7[%c0_15, %c0_16] : memref<1x16xf32, #tpu.memory_space<vmem>>, vector<1x16xf32>
    %21 = vector.broadcast %20 : vector<1x16xf32> to vector<32x16xf32>
    %22 = arith.addf %19, %21 : vector<32x16xf32>
    %c0_17 = arith.constant 0 : index
    %c0_18 = arith.constant 0 : index
    %23 = vector.load %arg8[%c0_17, %c0_18] : memref<32x16xf32, #tpu.memory_space<vmem>>, vector<32x16xf32>
    tpu.vector_store %arg8[%c0_17, %c0_18], %22 {strides = array<i32>} : memref<32x16xf32, #tpu.memory_space<vmem>>, vector<32x16xf32>,
    return
  }
  func.func @transform_0(%arg0: i32) -> (i32, i32) {
    %c0_i32 = arith.constant 0 : i32
    %c0_i32_0 = arith.constant 0 : i32
    return %arg0, %c0_i32 : i32, i32
  }
  func.func @transform_1(%arg0: i32) -> (i32, i32) {
    %c0_i32 = arith.constant 0 : i32
    %c0_i32_0 = arith.constant 0 : i32
    %c0_i32_1 = arith.constant 0 : i32
    return %c0_i32, %c0_i32_0 : i32, i32
  }
  func.func @transform_2(%arg0: i32) -> (i32, i32) {
    %c0_i32 = arith.constant 0 : i32
    %c0_i32_0 = arith.constant 0 : i32
    %c0_i32_1 = arith.constant 0 : i32
    return %c0_i32, %c0_i32_0 : i32, i32
  }
  func.func @transform_3(%arg0: i32) -> (i32, i32) {
    %c0_i32 = arith.constant 0 : i32
    %c0_i32_0 = arith.constant 0 : i32
    %c0_i32_1 = arith.constant 0 : i32
    return %c0_i32, %c0_i32_0 : i32, i32
  }
  func.func @transform_4(%arg0: i32) -> (i32, i32) {
    %c0_i32 = arith.constant 0 : i32
    %c0_i32_0 = arith.constant 0 : i32
    %c0_i32_1 = arith.constant 0 : i32
    return %c0_i32, %c0_i32_0 : i32, i32
  }
  func.func @transform_5(%arg0: i32) -> (i32, i32) {
    %c0_i32 = arith.constant 0 : i32
    %c0_i32_0 = arith.constant 0 : i32
    %c0_i32_1 = arith.constant 0 : i32
    return %c0_i32, %c0_i32_0 : i32, i32
  }
  func.func @transform_6(%arg0: i32) -> (i32, i32) {
    %c0_i32 = arith.constant 0 : i32
    %c0_i32_0 = arith.constant 0 : i32
    %c0_i32_1 = arith.constant 0 : i32
    return %c0_i32, %c0_i32_0 : i32, i32
  }
  func.func @transform_7(%arg0: i32) -> (i32, i32) {
    %c0_i32 = arith.constant 0 : i32
    %c0_i32_0 = arith.constant 0 : i32
    return %arg0, %c0_i32 : i32, i32
  }
}

</mosaic_0001>

<llo_original>
// kernel: tpu_custom_call.1
$region0: #{tpu_custom_call.1}
  #allocation0 [shape = 'u32[]', space=smem, size = 0x4, offset = 0x4, fixed_abs, tag = 'smem constant byte address 0x4 - core index']
  #allocation1 [shape = 'u32[72,128]{1,0:T(1,128)}', space=vmem, size = 0x9000, scoped, tag = 'internal scratch']
  %s0 = inlined_call_operand.vmem [shape: f32[128,80], index: 0, kind: input, shape index: {}]
  %s1 = inlined_call_operand.vmem [shape: bf16[80,128], index: 1, kind: input, shape index: {}]
  %s2 = inlined_call_operand.vmem [shape: f32[1,128], index: 2, kind: input, shape index: {}]
  %s3 = inlined_call_operand.vmem [shape: bf16[128,128], index: 3, kind: input, shape index: {}]
  %s4 = inlined_call_operand.vmem [shape: f32[1,128], index: 4, kind: input, shape index: {}]
  %s5 = inlined_call_operand.vmem [shape: bf16[128,16], index: 5, kind: input, shape index: {}]
  %s6 = inlined_call_operand.vmem [shape: f32[1,16], index: 6, kind: input, shape index: {}]
  %s7 = inlined_call_operand.vmem [shape: f32[128,16], index: 7, kind: output, shape index: {}]
  %s8 = sld [smem:[#allocation0]]
  $region61: #{tpu_custom_call.1} parent=0
    _
  %s10 = ssub.s32 1, %s8
  %s11 = scalar_select 0, %s10, %s8
  loop: start=0, step=1, limit=6
  $region2: #{tpu_custom_call.1} parent=0 // loop_pre_header
    _
  $region3: #{tpu_custom_call.1} parent=0 // loop_header
    %s13 = sphi 0, %s17
    %p14 = scmp.ge.s32.totalorder %s13, 6
    %s23 = sphi 0, %s25
    %s26 = sphi 0, %s23
    %s27 = sphi 0, %s26
    %s43 = sphi 0, %s27
    %s47 = sphi 0, %s47
    %s49 = sphi 0, %s47
    %s50 = sphi 0, %s49
    %s64 = sphi 0, %s50
    %s68 = sphi 0, %s68
    %s70 = sphi 0, %s68
    %s71 = sphi 0, %s70
    %s85 = sphi 0, %s71
    %s89 = sphi 0, %s89
    %s91 = sphi 0, %s89
    %s92 = sphi 0, %s91
    %s106 = sphi 0, %s92
    %s110 = sphi 0, %s110
    %s112 = sphi 0, %s110
    %s113 = sphi 0, %s112
    %s127 = sphi 0, %s113
    %s131 = sphi 0, %s131
    %s133 = sphi 0, %s131
    %s134 = sphi 0, %s133
    %s148 = sphi 0, %s134
    %s152 = sphi 0, %s152
    %s154 = sphi 0, %s152
    %s155 = sphi 0, %s154
    %s169 = sphi 0, %s155
    %s175 = sphi 0, %s177
    %s178 = sphi 0, %s175
    %s179 = sphi 0, %s178
    %s195 = sphi 0, %s179
  $region4: #{tpu_custom_call.1} parent=0 // loop_header_branch
    %16 = sbr.rel (%p14) target = $region8
  $region5: #{tpu_custom_call.1} parent=0 // loop_body
    %s18 = ssub.s32 %s13, 1
    %s19 = ssub.s32 %s13, 2
    %s20 = sadd.s32 %s13, 1
    %s21 = ssub.s32 %s13, %s20
    %p22 = scmp.eq.s32.totalorder %s21, 0
    %s24 = sadd.s32 %s23, 1
    %s25 = scalar_select %p22, %s23, %s24
    %p28 = pneg %p22
    %p29 = scmp.eq.s32.totalorder %s13, 3
    %p30 = por %p28, %p29
    %p31 = scmp.ne.s32.totalorder %s23, %s26
    %p32 = scmp.eq.s32.totalorder %s13, 0
    %p33 = por %p31, %p32
    %p34 = scmp.ne.s32.totalorder %s23, %s26
    %p35 = scmp.eq.s32.totalorder %s18, 3
    %p36 = por %p34, %p35
    %p37 = scmp.ne.s32.totalorder %s26, %s27
    %p38 = scmp.eq.s32.totalorder %s18, 0
    %p39 = por %p37, %p38
    %p40 = scmp.ne.s32.totalorder %s26, %s27
    %p41 = scmp.eq.s32.totalorder %s19, 3
    %p42 = por %p40, %p41
    %p44 = scmp.ne.s32.totalorder %s27, %s43
    %p45 = scmp.eq.s32.totalorder %s19, 0
    %p46 = por %p44, %p45
    %s48 = sadd.s32 %s47, 1
    %p51 = scmp.eq.s32.totalorder %s13, 3
    %p52 = scmp.ne.s32.totalorder %s47, %s49
    %p53 = scmp.eq.s32.totalorder %s13, 0
    %p54 = por %p52, %p53
    %p55 = scmp.ne.s32.totalorder %s47, %s49
    %p56 = scmp.eq.s32.totalorder %s18, 3
    %p57 = por %p55, %p56
    %p58 = scmp.ne.s32.totalorder %s49, %s50
    %p59 = scmp.eq.s32.totalorder %s18, 0
    %p60 = por %p58, %p59
    %p61 = scmp.ne.s32.totalorder %s49, %s50
    %p62 = scmp.eq.s32.totalorder %s19, 3
    %p63 = por %p61, %p62
    %p65 = scmp.ne.s32.totalorder %s50, %s64
    %p66 = scmp.eq.s32.totalorder %s19, 0
    %p67 = por %p65, %p66
    %s69 = sadd.s32 %s68, 1
    %p72 = scmp.eq.s32.totalorder %s13, 3
    %p73 = scmp.ne.s32.totalorder %s68, %s70
    %p74 = scmp.eq.s32.totalorder %s13, 0
    %p75 = por %p73, %p74
    %p76 = scmp.ne.s32.totalorder %s68, %s70
    %p77 = scmp.eq.s32.totalorder %s18, 3
    %p78 = por %p76, %p77
    %p79 = scmp.ne.s32.totalorder %s70, %s71
    %p80 = scmp.eq.s32.totalorder %s18, 0
    %p81 = por %p79, %p80
    %p82 = scmp.ne.s32.totalorder %s70, %s71
    %p83 = scmp.eq.s32.totalorder %s19, 3
    %p84 = por %p82, %p83
    %p86 = scmp.ne.s32.totalorder %s71, %s85
    %p87 = scmp.eq.s32.totalorder %s19, 0
    %p88 = por %p86, %p87
    %s90 = sadd.s32 %s89, 1
    %p93 = scmp.eq.s32.totalorder %s13, 3
    %p94 = scmp.ne.s32.totalorder %s89, %s91
    %p95 = scmp.eq.s32.totalorder %s13, 0
    %p96 = por %p94, %p95
    %p97 = scmp.ne.s32.totalorder %s89, %s91
    %p98 = scmp.eq.s32.totalorder %s18, 3
    %p99 = por %p97, %p98
    %p100 = scmp.ne.s32.totalorder %s91, %s92
    %p101 = scmp.eq.s32.totalorder %s18, 0
    %p102 = por %p100, %p101
    %p103 = scmp.ne.s32.totalorder %s91, %s92
    %p104 = scmp.eq.s32.totalorder %s19, 3
    %p105 = por %p103, %p104
    %p107 = scmp.ne.s32.totalorder %s92, %s106
    %p108 = scmp.eq.s32.totalorder %s19, 0
    %p109 = por %p107, %p108
    %s111 = sadd.s32 %s110, 1
    %p114 = scmp.eq.s32.totalorder %s13, 3
    %p115 = scmp.ne.s32.totalorder %s110, %s112
    %p116 = scmp.eq.s32.totalorder %s13, 0
    %p117 = por %p115, %p116
    %p118 = scmp.ne.s32.totalorder %s110, %s112
    %p119 = scmp.eq.s32.totalorder %s18, 3
    %p120 = por %p118, %p119
    %p121 = scmp.ne.s32.totalorder %s112, %s113
    %p122 = scmp.eq.s32.totalorder %s18, 0
    %p123 = por %p121, %p122
    %p124 = scmp.ne.s32.totalorder %s112, %s113
    %p125 = scmp.eq.s32.totalorder %s19, 3
    %p126 = por %p124, %p125
    %p128 = scmp.ne.s32.totalorder %s113, %s127
    %p129 = scmp.eq.s32.totalorder %s19, 0
    %p130 = por %p128, %p129
    %s132 = sadd.s32 %s131, 1
    %p135 = scmp.eq.s32.totalorder %s13, 3
    %p136 = scmp.ne.s32.totalorder %s131, %s133
    %p137 = scmp.eq.s32.totalorder %s13, 0
    %p138 = por %p136, %p137
    %p139 = scmp.ne.s32.totalorder %s131, %s133
    %p140 = scmp.eq.s32.totalorder %s18, 3
    %p141 = por %p139, %p140
    %p142 = scmp.ne.s32.totalorder %s133, %s134
    %p143 = scmp.eq.s32.totalorder %s18, 0
    %p144 = por %p142, %p143
    %p145 = scmp.ne.s32.totalorder %s133, %s134
    %p146 = scmp.eq.s32.totalorder %s19, 3
    %p147 = por %p145, %p146
    %p149 = scmp.ne.s32.totalorder %s134, %s148
    %p150 = scmp.eq.s32.totalorder %s19, 0
    %p151 = por %p149, %p150
    %s153 = sadd.s32 %s152, 1
    %p156 = scmp.eq.s32.totalorder %s13, 3
    %p157 = scmp.ne.s32.totalorder %s152, %s154
    %p158 = scmp.eq.s32.totalorder %s13, 0
    %p159 = por %p157, %p158
    %p160 = scmp.ne.s32.totalorder %s152, %s154
    %p161 = scmp.eq.s32.totalorder %s18, 3
    %p162 = por %p160, %p161
    %p163 = scmp.ne.s32.totalorder %s154, %s155
    %p164 = scmp.eq.s32.totalorder %s18, 0
    %p165 = por %p163, %p164
    %p166 = scmp.ne.s32.totalorder %s154, %s155
    %p167 = scmp.eq.s32.totalorder %s19, 3
    %p168 = por %p166, %p167
    %p170 = scmp.ne.s32.totalorder %s155, %s169
    %p171 = scmp.eq.s32.totalorder %s19, 0
    %p172 = por %p170, %p171
    %s173 = ssub.s32 %s13, %s20
    %p174 = scmp.eq.s32.totalorder %s173, 0
    %s176 = sadd.s32 %s175, 1
    %s177 = scalar_select %p174, %s175, %s176
    %p180 = pneg %p174
    %p181 = scmp.eq.s32.totalorder %s13, 3
    %p182 = por %p180, %p181
    %p183 = scmp.ne.s32.totalorder %s175, %s178
    %p184 = scmp.eq.s32.totalorder %s13, 0
    %p185 = por %p183, %p184
    %p186 = scmp.ne.s32.totalorder %s175, %s178
    %p187 = scmp.eq.s32.totalorder %s18, 3
    %p188 = por %p186, %p187
    %p189 = scmp.ne.s32.totalorder %s178, %s179
    %p190 = scmp.eq.s32.totalorder %s18, 0
    %p191 = por %p189, %p190
    %p192 = scmp.ne.s32.totalorder %s178, %s179
    %p193 = scmp.eq.s32.totalorder %s19, 3
    %p194 = por %p192, %p193
    %p196 = scmp.ne.s32.totalorder %s179, %s195
    %p197 = scmp.eq.s32.totalorder %s19, 0
    %p198 = por %p196, %p197
    %p199 = scmp.le.s32.totalorder 1, %s13
    %p200 = scmp.lt.s32.totalorder %s13, 5
    %p201 = pnand %p199, %p200
    %p202 = pneg %p201
    // Predicated region
    $region9: #{tpu_custom_call.1} parent=5 // pred_check
      _
    $region10: #{tpu_custom_call.1} parent=5 // pred_check_branch
      %204 = sbr.rel (%p201) target = $region12
    $region11: #{tpu_custom_call.1} parent=5 // pred_region
      %s205 = ssub.s32 %s13, 1
      // Predicated region
      $region13: #{tpu_custom_call.1} parent=11 // pred_check
        %p206 = pneg %p60
      $region14: #{tpu_custom_call.1} parent=11 // pred_check_branch
        %208 = sbr.rel (%p206) target = $region16
      $region15: #{tpu_custom_call.1} parent=11 // pred_region
        _
      $region16: #{tpu_custom_call.1} parent=11 // pred_fallthru
        _
      // Predicated region
      $region17: #{tpu_custom_call.1} parent=11 // pred_check
        %p209 = pneg %p81
      $region18: #{tpu_custom_call.1} parent=11 // pred_check_branch
        %211 = sbr.rel (%p209) target = $region20
      $region19: #{tpu_custom_call.1} parent=11 // pred_region
        _
      $region20: #{tpu_custom_call.1} parent=11 // pred_fallthru
        _
      // Predicated region
      $region21: #{tpu_custom_call.1} parent=11 // pred_check
        %p212 = pneg %p102
      $region22: #{tpu_custom_call.1} parent=11 // pred_check_branch
        %214 = sbr.rel (%p212) target = $region24
      $region23: #{tpu_custom_call.1} parent=11 // pred_region
        _
      $region24: #{tpu_custom_call.1} parent=11 // pred_fallthru
        _
      // Predicated region
      $region25: #{tpu_custom_call.1} parent=11 // pred_check
        %p215 = pneg %p123
      $region26: #{tpu_custom_call.1} parent=11 // pred_check_branch
        %217 = sbr.rel (%p215) target = $region28
      $region27: #{tpu_custom_call.1} parent=11 // pred_region
        _
      $region28: #{tpu_custom_call.1} parent=11 // pred_fallthru
        _
      // Predicated region
      $region29: #{tpu_custom_call.1} parent=11 // pred_check
        %p218 = pneg %p144
      $region30: #{tpu_custom_call.1} parent=11 // pred_check_branch
        %220 = sbr.rel (%p218) target = $region32
      $region31: #{tpu_custom_call.1} parent=11 // pred_region
        _
      $region32: #{tpu_custom_call.1} parent=11 // pred_fallthru
        _
      // Predicated region
      $region33: #{tpu_custom_call.1} parent=11 // pred_check
        %p221 = pneg %p165
      $region34: #{tpu_custom_call.1} parent=11 // pred_check_branch
        %223 = sbr.rel (%p221) target = $region36
      $region35: #{tpu_custom_call.1} parent=11 // pred_region
        _
      $region36: #{tpu_custom_call.1} parent=11 // pred_fallthru
        _
    $region12: #{tpu_custom_call.1} parent=5 // pred_fallthru
      _
    %p224 = scmp.lt.s32.totalorder %s13, 4
    // Predicated region
    $region37: #{tpu_custom_call.1} parent=5 // pred_check
      %p225 = pneg %p224
    $region38: #{tpu_custom_call.1} parent=5 // pred_check_branch
      %227 = sbr.rel (%p225) target = $region40
    $region39: #{tpu_custom_call.1} parent=5 // pred_region
      // Predicated region
      $region41: #{tpu_custom_call.1} parent=39 // pred_check
        %p228 = pneg %p33
      $region42: #{tpu_custom_call.1} parent=39 // pred_check_branch
        %230 = sbr.rel (%p228) target = $region44
      $region43: #{tpu_custom_call.1} parent=39 // pred_region
        %s231 = smul.u32 4, %s13
        %p232 = scmp.lt.s32.totalorder %s231, 15
        %s233 = scalar_select %p232, %s231, 15
        %s234 = smul.addr %s233, 8
        %s235 = scalar_lea.vmem %s0, %s234
        %s236 = smul.u32 4, %s13
      $region44: #{tpu_custom_call.1} parent=39 // pred_fallthru
        _
    $region40: #{tpu_custom_call.1} parent=5 // pred_fallthru
      _
    %p237 = scmp.le.s32.totalorder 1, %s13
    %p238 = scmp.lt.s32.totalorder %s13, 5
    %p239 = pnand %p237, %p238
    %p240 = pneg %p239
    // Predicated region
    $region45: #{tpu_custom_call.1} parent=5 // pred_check
      _
    $region46: #{tpu_custom_call.1} parent=5 // pred_check_branch
      %242 = sbr.rel (%p239) target = $region48
    $region47: #{tpu_custom_call.1} parent=5 // pred_region
      %s243 = ssub.s32 %s13, 1
      %s244 = smul.u32 4, %s18
      %p245 = scmp.lt.s32.totalorder %s244, 15
      %s246 = scalar_select %p245, %s244, 15
      %s247 = smul.addr %s246, 8
      %s248 = scalar_lea.vmem %s0, %s247
      %p249 = pneg %p39
      %p250 = pneg %p36
      %p251 = pneg %p60
      %p252 = pneg %p57
      %p253 = pneg %p81
      %p254 = pneg %p78
      %p255 = pneg %p102
      %p256 = pneg %p99
      %p257 = pneg %p123
      %p258 = pneg %p120
      %p259 = pneg %p144
      %p260 = pneg %p141
      %p261 = pneg %p165
      %p262 = pneg %p162
      %p263 = pneg %p191
      %p264 = pneg %p188
      %s265 = smul.u32 4, %s18
      %p266 = scmp.lt.s32.totalorder %s265, 15
      %s267 = scalar_select %p266, %s265, 15
      %s268 = smul.addr %s267, 8
      %s269 = scalar_lea.vmem %s7, %s268
      %s270 = smul.u32 4, %s18
      %p271 = scmp.lt.s32.totalorder %s270, 15
      %s272 = scalar_select %p271, %s270, 15
      %s273 = smul.addr %s272, 8
      %s274 = scalar_lea.vmem %s0, %s273
      %s275 = smul.u32 4, %s18
      %s276 = smul.u32 4, %s18
      %p277 = scmp.lt.s32.totalorder %s276, 15
      %s278 = scalar_select %p277, %s276, 15
      %s279 = smul.addr %s278, 8
      %s280 = scalar_lea.vmem %s7, %s279
      %s281 = smul.u32 4, %s18
      %v283 = vld [vmem:[%s274] sm:$0xff]
      %v284 = vld [vmem:[%s274 + $0x8] sm:$0xff]
      %v285 = vld [vmem:[%s274 + $0x10] sm:$0xff]
      %v286 = vld [vmem:[%s274 + $0x18] sm:$0xff]
      %v287 = vpack.c.bf16 %v284, %v283
      %v288 = vpack.c.bf16 %v286, %v285
      %v289 = vld [vmem:[%s1] sm:$0xf]
      %v290 = vld [vmem:[%s1 + $0x4] sm:$0xf]
      %v291 = vld [vmem:[%s1 + $0x8] sm:$0xf]
      %v292 = vld [vmem:[%s1 + $0xc] sm:$0xf]
      %v293 = vld [vmem:[%s1 + $0x10] sm:$0xf]
      %v294 = vld [vmem:[%s1 + $0x14] sm:$0xf]
      %v295 = vld [vmem:[%s1 + $0x18] sm:$0xf]
      %v296 = vld [vmem:[%s1 + $0x1c] sm:$0xf]
      %v297 = vld [vmem:[%s1 + $0x20] sm:$0xf]
      %v298 = vld [vmem:[%s1 + $0x24] sm:$0xf]
      %v299 = vld [vmem:[%s2] sm:$0x1]
      %v301 = vperm.slane %v299, 0
      %v313 = vunpack.c.l.b16 %v289
      %v314 = vunpack.c.l.b16 %v290
      %v315 = vunpack.c.l.b16 %v291
      %v316 = vunpack.c.l.b16 %v292
      %v317 = vunpack.c.l.b16 %v293
      %v318 = vunpack.c.l.b16 %v294
      %v319 = vunpack.c.l.b16 %v295
      %v320 = vunpack.c.l.b16 %v296
      %v321 = vunpack.c.l.b16 %v297
      %v322 = vunpack.c.l.b16 %v298
      %v323 = vpack.c.b16 %v314, %v313
      %v324 = vpack.c.b16 %v316, %v315
      %v325 = vpack.c.b16 %v318, %v317
      %v326 = vpack.c.b16 %v320, %v319
      %v327 = vpack.c.b16 %v322, %v321
      %vm333 = vcmask 654336
      %v335 = vsel %vm333, %v287, 0
      %v338 = vsel %vm333, %v288, 0
      %340 = vmatpush.bf16.msra.mxu0 0
      %341 = vmatpush.bf16.msra.mxu0 0
      %342 = vmatpush.bf16.msra.mxu0 0
      %343 = vmatpush.bf16.msra.mxu0 %v327
      %344 = vmatpush.bf16.msra.mxu0 %v326
      %345 = vmatpush.bf16.msra.mxu0 %v325
      %346 = vmatpush.bf16.msra.mxu0 %v324
      %347 = vmatpush.bf16.msra.mxu0 %v323
      %348 = vmatmul.bf16.gmra.mxu0 %v335
      %v349 = vpop.f32.mrf.mxu0
      %v350 = vadd.f32 %v301, %v349
      %v351 = vpop.f32.mrf.mxu0
      %v352 = vadd.f32 %v301, %v351
      %353 = vmatmul.bf16.gmra.mxu0 %v338
      %v354 = vpop.f32.mrf.mxu0
      %v355 = vadd.f32 %v301, %v354
      %v356 = vpop.f32.mrf.mxu0
      %v357 = vadd.f32 %v301, %v356
      %358 = vdwg.mxu0
      %v359 = vmax.f32 %v350, 0.0
      %v360 = vmax.f32 %v352, 0.0
      %v361 = vmax.f32 %v355, 0.0
      %v362 = vmax.f32 %v357, 0.0
      %v363 = vpack.c.bf16 %v360, %v359
      %v364 = vpack.c.bf16 %v362, %v361
      %v365 = vld [vmem:[%s3] sm:$0xf]
      %v366 = vld [vmem:[%s3 + $0x4] sm:$0xf]
      %v367 = vld [vmem:[%s3 + $0x8] sm:$0xf]
      %v368 = vld [vmem:[%s3 + $0xc] sm:$0xf]
      %v369 = vld [vmem:[%s3 + $0x10] sm:$0xf]
      %v370 = vld [vmem:[%s3 + $0x14] sm:$0xf]
      %v371 = vld [vmem:[%s3 + $0x18] sm:$0xf]
      %v372 = vld [vmem:[%s3 + $0x1c] sm:$0xf]
      %v373 = vld [vmem:[%s3 + $0x20] sm:$0xf]
      %v374 = vld [vmem:[%s3 + $0x24] sm:$0xf]
      %v375 = vld [vmem:[%s3 + $0x28] sm:$0xf]
      %v376 = vld [vmem:[%s3 + $0x2c] sm:$0xf]
      %v377 = vld [vmem:[%s3 + $0x30] sm:$0xf]
      %v378 = vld [vmem:[%s3 + $0x34] sm:$0xf]
      %v379 = vld [vmem:[%s3 + $0x38] sm:$0xf]
      %v380 = vld [vmem:[%s3 + $0x3c] sm:$0xf]
      %v381 = vld [vmem:[%s4] sm:$0x1]
      %v383 = vperm.slane %v381, 0
      %v401 = vunpack.c.l.b16 %v365
      %v402 = vunpack.c.l.b16 %v366
      %v403 = vunpack.c.l.b16 %v367
      %v404 = vunpack.c.l.b16 %v368
      %v405 = vunpack.c.l.b16 %v369
      %v406 = vunpack.c.l.b16 %v370
      %v407 = vunpack.c.l.b16 %v371
      %v408 = vunpack.c.l.b16 %v372
      %v409 = vunpack.c.l.b16 %v373
      %v410 = vunpack.c.l.b16 %v374
      %v411 = vunpack.c.l.b16 %v375
      %v412 = vunpack.c.l.b16 %v376
      %v413 = vunpack.c.l.b16 %v377
      %v414 = vunpack.c.l.b16 %v378
      %v415 = vunpack.c.l.b16 %v379
      %v416 = vunpack.c.l.b16 %v380
      %v417 = vpack.c.b16 %v402, %v401
      %v418 = vpack.c.b16 %v404, %v403
      %v419 = vpack.c.b16 %v406, %v405
      %v420 = vpack.c.b16 %v408, %v407
      %v421 = vpack.c.b16 %v410, %v409
      %v422 = vpack.c.b16 %v412, %v411
      %v423 = vpack.c.b16 %v414, %v413
      %v424 = vpack.c.b16 %v416, %v415
      %433 = vmatpush.bf16.msra.mxu0 %v424
      %434 = vmatpush.bf16.msra.mxu0 %v423
      %435 = vmatpush.bf16.msra.mxu0 %v422
      %436 = vmatpush.bf16.msra.mxu0 %v421
      %437 = vmatpush.bf16.msra.mxu0 %v420
      %438 = vmatpush.bf16.msra.mxu0 %v419
      %439 = vmatpush.bf16.msra.mxu0 %v418
      %440 = vmatpush.bf16.msra.mxu0 %v417
      %441 = vmatmul.bf16.gmra.mxu0 %v363
      %v442 = vpop.f32.mrf.mxu0
      %v443 = vadd.f32 %v383, %v442
      %v444 = vpop.f32.mrf.mxu0
      %v445 = vadd.f32 %v383, %v444
      %446 = vmatmul.bf16.gmra.mxu0 %v364
      %v447 = vpop.f32.mrf.mxu0
      %v448 = vadd.f32 %v383, %v447
      %v449 = vpop.f32.mrf.mxu0
      %v450 = vadd.f32 %v383, %v449
      %451 = vdwg.mxu0
      %v452 = vmax.f32 %v443, 0.0
      %v453 = vmax.f32 %v445, 0.0
      %v454 = vmax.f32 %v448, 0.0
      %v455 = vmax.f32 %v450, 0.0
      %v456 = vpack.c.bf16 %v453, %v452
      %v457 = vpack.c.bf16 %v455, %v454
      %v458 = vld [vmem:[%s5] sm:$0xf]
      %v459 = vld [vmem:[%s5 + $0x4] sm:$0xf]
      %v460 = vld [vmem:[%s5 + $0x8] sm:$0xf]
      %v461 = vld [vmem:[%s5 + $0xc] sm:$0xf]
      %v462 = vld [vmem:[%s5 + $0x10] sm:$0xf]
      %v463 = vld [vmem:[%s5 + $0x14] sm:$0xf]
      %v464 = vld [vmem:[%s5 + $0x18] sm:$0xf]
      %v465 = vld [vmem:[%s5 + $0x1c] sm:$0xf]
      %v466 = vld [vmem:[%s5 + $0x20] sm:$0xf]
      %v467 = vld [vmem:[%s5 + $0x24] sm:$0xf]
      %v468 = vld [vmem:[%s5 + $0x28] sm:$0xf]
      %v469 = vld [vmem:[%s5 + $0x2c] sm:$0xf]
      %v470 = vld [vmem:[%s5 + $0x30] sm:$0xf]
      %v471 = vld [vmem:[%s5 + $0x34] sm:$0xf]
      %v472 = vld [vmem:[%s5 + $0x38] sm:$0xf]
      %v473 = vld [vmem:[%s5 + $0x3c] sm:$0xf]
      %v474 = vld [vmem:[%s6] sm:$0x1]
      %v476 = vperm.slane %v474, 0
      %v494 = vunpack.c.l.b16 %v458
      %v495 = vunpack.c.l.b16 %v459
      %v496 = vunpack.c.l.b16 %v460
      %v497 = vunpack.c.l.b16 %v461
      %v498 = vunpack.c.l.b16 %v462
      %v499 = vunpack.c.l.b16 %v463
      %v500 = vunpack.c.l.b16 %v464
      %v501 = vunpack.c.l.b16 %v465
      %v502 = vunpack.c.l.b16 %v466
      %v503 = vunpack.c.l.b16 %v467
      %v504 = vunpack.c.l.b16 %v468
      %v505 = vunpack.c.l.b16 %v469
      %v506 = vunpack.c.l.b16 %v470
      %v507 = vunpack.c.l.b16 %v471
      %v508 = vunpack.c.l.b16 %v472
      %v509 = vunpack.c.l.b16 %v473
      %v510 = vpack.c.b16 %v495, %v494
      %v511 = vpack.c.b16 %v497, %v496
      %v512 = vpack.c.b16 %v499, %v498
      %v513 = vpack.c.b16 %v501, %v500
      %v514 = vpack.c.b16 %v503, %v502
      %v515 = vpack.c.b16 %v505, %v504
      %v516 = vpack.c.b16 %v507, %v506
      %v517 = vpack.c.b16 %v509, %v508
      %526 = vmatpush.bf16.msra.mxu0 %v517
      %527 = vmatpush.bf16.msra.mxu0 %v516
      %528 = vmatpush.bf16.msra.mxu0 %v515
      %529 = vmatpush.bf16.msra.mxu0 %v514
      %530 = vmatpush.bf16.msra.mxu0 %v513
      %531 = vmatpush.bf16.msra.mxu0 %v512
      %532 = vmatpush.bf16.msra.mxu0 %v511
      %533 = vmatpush.bf16.msra.mxu0 %v510
      %534 = vmatmul.bf16.gmra.mxu0 %v456
      %v535 = vpop.f32.mrf.mxu0
      %v536 = vadd.f32 %v476, %v535
      %v537 = vpop.f32.mrf.mxu0
      %v538 = vadd.f32 %v476, %v537
      %539 = vmatmul.bf16.gmra.mxu0 %v457
      %v540 = vpop.f32.mrf.mxu0
      %v541 = vadd.f32 %v476, %v540
      %v542 = vpop.f32.mrf.mxu0
      %v543 = vadd.f32 %v476, %v542
      %544 = vdwg.mxu0
      %vm545 = vcmask 130048
      %546 = vst.msk [vmem:[%s280] sm:$0xff] %vm545, %v536
      %547 = vst.msk [vmem:[%s280 + $0x8] sm:$0xff] %vm545, %v538
      %548 = vst.msk [vmem:[%s280 + $0x10] sm:$0xff] %vm545, %v541
      %549 = vst.msk [vmem:[%s280 + $0x18] sm:$0xff] %vm545, %v543
      %s550 = smul.u32 4, %s18
      %p551 = scmp.lt.s32.totalorder %s550, 15
      %s552 = scalar_select %p551, %s550, 15
      %s553 = smul.addr %s552, 8
      %s554 = scalar_lea.vmem %s7, %s553
      // Predicated region
      $region49: #{tpu_custom_call.1} parent=47 // pred_check
        %p555 = pneg %p188
      $region50: #{tpu_custom_call.1} parent=47 // pred_check_branch
        %557 = sbr.rel (%p555) target = $region52
      $region51: #{tpu_custom_call.1} parent=47 // pred_region
        %s558 = smul.u32 4, %s18
      $region52: #{tpu_custom_call.1} parent=47 // pred_fallthru
        _
    $region48: #{tpu_custom_call.1} parent=5 // pred_fallthru
      _
    %p559 = scmp.le.s32.totalorder 2, %s13
    // Predicated region
    $region53: #{tpu_custom_call.1} parent=5 // pred_check
      %p560 = pneg %p559
    $region54: #{tpu_custom_call.1} parent=5 // pred_check_branch
      %562 = sbr.rel (%p560) target = $region56
    $region55: #{tpu_custom_call.1} parent=5 // pred_region
      %s563 = ssub.s32 %s13, 2
      // Predicated region
      $region57: #{tpu_custom_call.1} parent=55 // pred_check
        %p564 = pneg %p194
      $region58: #{tpu_custom_call.1} parent=55 // pred_check_branch
        %566 = sbr.rel (%p564) target = $region60
      $region59: #{tpu_custom_call.1} parent=55 // pred_region
        %s567 = smul.u32 4, %s19
        %p568 = scmp.lt.s32.totalorder %s567, 15
        %s569 = scalar_select %p568, %s567, 15
        %s570 = smul.addr %s569, 8
        %s571 = scalar_lea.vmem %s7, %s570
      $region60: #{tpu_custom_call.1} parent=55 // pred_fallthru
        _
    $region56: #{tpu_custom_call.1} parent=5 // pred_fallthru
      _
  $region6: #{tpu_custom_call.1} parent=0 // loop_footer
    %s17 = sadd.s32 1, %s13
  $region7: #{tpu_custom_call.1} parent=0 // loop_footer_branch
    %12 = sbr.rel target = $region3
  $region8: #{tpu_custom_call.1} parent=0 // loop_exit
    _

</llo_original>
